<compile_context>
chip_gen: v7x
topology: tpu7x:2x2x1
jax: 0.10.0
libtpu: 0.0.40
codegen_flags: <defaults>
</compile_context>

<pallas_src>
import functools
import math

import numpy as np
import jax
import jax.numpy as jnp
from jax import lax
from jax.experimental import pallas as pl
from jax.experimental.pallas import tpu as pltpu


def _cdiv(a, b):
    return -(-a // b)


def _focal_loss_kernel(pred_ref, label_ref, out_ref, *,
                       tile_m, tile_n, rows_valid, n_blocks, needs_mask,
                       gamma, alpha):
    blk = pl.program_id(0)

    x = pred_ref[...].astype(jnp.float32)          # (tile_m, tile_n), lane-dense
    y = label_ref[...].astype(jnp.float32)

    # Numerically stable BCE-with-logits (PyTorch formulation):
    #   bce = max(x, 0) - x*y + log(1 + exp(-|x|))
    # jnp.log(1 + e) instead of log1p: they differ only when e < ~1e-7, where
    # the whole term is negligible and the modulating factor also vanishes.
    e = jnp.exp(-jnp.abs(x))
    bce = jnp.maximum(x, 0.0) - x * y + jnp.log(1.0 + e)

    # sigmoid(x), reusing e = exp(-|x|): one EUP divide total.
    # (pl.reciprocal(..., approx=True) would move the Newton steps off the
    #  VALU but adds ~1e-3 relative error -- kept exact to match tolerances.)
    inv = 1.0 / (1.0 + e)
    prob = jnp.where(x >= 0, inv, e * inv)

    # 1 - p_t == prob*(1 - 2y) + y          (constants folded at trace time)
    u = prob * (1.0 - 2.0 * y) + y
    if gamma == 1.5:
        mod = u * jnp.sqrt(u)                      # (1 - p_t) ** 1.5 without pow
    elif gamma == 2.0:
        mod = u * u
    elif gamma == 1.0:
        mod = u
    else:
        mod = u ** gamma
    loss = bce * mod
    if alpha > 0:
        # label*alpha + (1-label)*(1-alpha) == (1-alpha) + label*(2*alpha-1)
        loss = loss * (y * (2.0 * alpha - 1.0) + (1.0 - alpha))

    def _write(v):
        # One VALU-tree reduction per (multi-MiB) block; the cross-lane part
        # is a single vreg reduce and the final sum over blocks happens in
        # the wrapper, so no cross-step accumulator / scalar chain is needed.
        out_ref[...] = jnp.broadcast_to(jnp.sum(v), out_ref.shape)

    if needs_mask:
        # Only the last row block reads (garbage) past the end of the array;
        # keep the mask entirely out of the steady state.
        @pl.when(blk < n_blocks - 1)
        def _():
            _write(loss)

        @pl.when(blk == n_blocks - 1)
        def _():
            row = blk * tile_m + lax.broadcasted_iota(
                jnp.int32, (tile_m, tile_n), 0)
            _write(jnp.where(row < rows_valid, loss, 0.0))
    else:
        _write(loss)


_LANE_TILES = (1024, 512, 256, 128)
_TARGET_BLOCK_ELEMS = 512 * 1024        # ~2 MiB per input block at f32


@functools.partial(jax.jit, static_argnames=("gamma", "alpha"))
def focal_loss(pred, label, gamma=1.5, alpha=0.25):
    """Pallas TPU implementation of ultralytics FocalLoss.forward -> scalar."""
    assert pred.ndim >= 2, "FocalLoss reduces with loss.mean(1).sum()"
    assert pred.shape == label.shape
    gamma = float(gamma)
    alpha = float(alpha)
    divisor = float(pred.shape[1])       # loss.mean(1).sum() == sum(loss)/shape[1]
    total = math.prod(pred.shape)
    assert total < 2**31, "row indexing uses int32"

    tile_n = next((t for t in _LANE_TILES if total % t == 0), None)
    if tile_n is not None:
        # Zero-copy path: reshape of a contiguous array is a bitcast.
        rows = total // tile_n
        p2 = pred.reshape(rows, tile_n)
        l2 = label.reshape(rows, tile_n)
    else:
        # Rare fallback (element count not a multiple of 128): pad the flat
        # arrays.  Pad values are chosen so every padded element contributes
        # exactly 0 loss (pred=-100, label=0 -> bce == 0 in f32), so no mask
        # or analytic correction is required for the padded region.
        tile_n = 512
        rows = _cdiv(total, tile_n)
        pad = rows * tile_n - total
        p2 = jnp.pad(pred.reshape(-1), (0, pad),
                     constant_values=-100.0).reshape(rows, tile_n)
        l2 = jnp.pad(label.reshape(-1), (0, pad),
                     constant_values=0.0).reshape(rows, tile_n)

    max_tile_m = max(8, (_TARGET_BLOCK_ELEMS // tile_n) // 8 * 8)
    if rows < 8:
        tile_m = rows                                # equals full dim: allowed
    else:
        tile_m = min(max_tile_m, (rows // 8) * 8)    # multiple of 8, <= rows
    n_blocks = _cdiv(rows, tile_m)
    needs_mask = (rows % tile_m) != 0                # last block reads past end

    kernel = functools.partial(
        _focal_loss_kernel, tile_m=tile_m, tile_n=tile_n, rows_valid=rows,
        n_blocks=n_blocks, needs_mask=needs_mask, gamma=gamma, alpha=alpha)

    partials = pl.pallas_call(
        kernel,
        out_shape=jax.ShapeDtypeStruct((n_blocks, 8, 128), jnp.float32),
        grid_spec=pltpu.PrefetchScalarGridSpec(
            num_scalar_prefetch=0,
            grid=(n_blocks,),
            in_specs=[
                pl.BlockSpec((tile_m, tile_n), lambda i: (i, 0)),
                pl.BlockSpec((tile_m, tile_n), lambda i: (i, 0)),
            ],
            out_specs=pl.BlockSpec((1, 8, 128), lambda i: (i, 0, 0)),
        ),
        compiler_params=pltpu.CompilerParams(
            # Independent per-block outputs -> axis can be sharded across
            # TensorCores on multi-core chips; on single-TC chips this is a
            # measured no-op.  (Use pltpu.CORE_PARALLEL if a toolchain does
            # not split plain "parallel".)
            dimension_semantics=("parallel",),
            # v5e's default scoped VMEM is only 16 MiB; 2 inputs x 2 pipeline
            # buffers x ~2 MiB plus the live f32 intermediates need more.
            vmem_limit_bytes=32 * 1024 * 1024),
    )(p2, l2)

    return jnp.sum(partials[:, 0, 0]) / divisor


def _reference_focal_loss(pred, label, gamma=1.5, alpha=0.25):
    """Pure-JAX reference mirroring the PyTorch FocalLoss math."""
    pred = pred.astype(jnp.float32)
    label = label.astype(jnp.float32)
    bce = (jnp.maximum(pred, 0.0) - pred * label
           + jnp.log1p(jnp.exp(-jnp.abs(pred))))
    prob = jax.nn.sigmoid(pred)
    p_t = label * prob + (1.0 - label) * (1.0 - prob)
    loss = bce * (1.0 - p_t) ** gamma
    if alpha > 0:
        loss = loss * (label * alpha + (1.0 - label) * (1.0 - alpha))
    return loss.mean(1).sum()


if __name__ == "__main__":
    key = jax.random.PRNGKey(0)
    keys = jax.random.split(key, 10)

    def _check(pred, label, rtol, atol):
        out = focal_loss(pred, label)
        jax.block_until_ready(out)
        ref = _reference_focal_loss(pred, label)
        np.testing.assert_allclose(np.asarray(out), np.asarray(ref),
                                   rtol=rtol, atol=atol)

    # 1) Small detection-style (batch, anchors, classes): zero-copy path,
    #    single block.
    p = jax.random.normal(keys[0], (2, 8, 64), dtype=jnp.float32) * 2.0
    l = (jax.random.uniform(keys[1], (2, 8, 64)) > 0.7).astype(jnp.float32)
    _check(p, l, rtol=1e-4, atol=1e-6)

    # 2) Rows not a multiple of the row tile: exercises the pl.when-guarded
    #    edge-block mask (garbage-read tail).
    p = jax.random.normal(keys[2], (2, 9, 128), dtype=jnp.float32) * 2.0
    l = (jax.random.uniform(keys[3], (2, 9, 128)) > 0.7).astype(jnp.float32)
    _check(p, l, rtol=1e-4, atol=1e-6)

    # 3) Element count not a multiple of 128: exercises the zero-loss pad
    #    fallback path.
    p = jax.random.normal(keys[4], (2, 5, 7), dtype=jnp.float32) * 2.0
    l = (jax.random.uniform(keys[5], (2, 5, 7)) > 0.5).astype(jnp.float32)
    _check(p, l, rtol=1e-4, atol=1e-6)

    # 4) Larger multi-block case (3 parallel blocks incl. a masked edge block).
    p = jax.random.normal(keys[6], (8, 2048, 80), dtype=jnp.float32) * 2.0
    l = (jax.random.uniform(keys[7], (8, 2048, 80)) > 0.9).astype(jnp.float32)
    _check(p, l, rtol=5e-4, atol=1e-5)

    # 5) bf16 inputs streamed directly (kernel upcasts to f32 internally).
    p = (jax.random.normal(keys[8], (4, 128, 64), dtype=jnp.float32) * 2.0
         ).astype(jnp.bfloat16)
    l = (jax.random.uniform(keys[9], (4, 128, 64)) > 0.8).astype(jnp.bfloat16)
    _check(p, l, rtol=5e-4, atol=1e-5)

    print("KERNEL_OK")
</pallas_src>

<mosaic_0001>
module attributes {stable_mosaic.version = 11 : i64} {
  func.func @_focal_loss_kernel(%arg0: i32, %arg1: memref<1x1024xf32, #tpu.memory_space<vmem>>, %arg2: memref<1x1024xf32, #tpu.memory_space<vmem>>, %arg3: memref<1x8x128xf32, #tpu.memory_space<vmem>>) attributes {dimension_semantics = [#tpu.dimension_semantics<parallel>], iteration_bounds = array<i64: 1>, scalar_prefetch = 0 : i64, scratch_operands = 0 : i64, tpu.core_type = #tpu.core_type<tc>, window_params = [{transform_indices = @transform_0, window_bounds = array<i64: 1, 1024>}, {transform_indices = @transform_1, window_bounds = array<i64: 1, 1024>}, {transform_indices = @transform_2, window_bounds = array<i64: 1, 8, 128>}]} {
    %c0 = arith.constant 0 : index
    %c0_0 = arith.constant 0 : index
    %0 = vector.load %arg1[%c0, %c0_0] : memref<1x1024xf32, #tpu.memory_space<vmem>>, vector<1x1024xf32>
    %c0_1 = arith.constant 0 : index
    %c0_2 = arith.constant 0 : index
    %1 = vector.load %arg2[%c0_1, %c0_2] : memref<1x1024xf32, #tpu.memory_space<vmem>>, vector<1x1024xf32>
    %2 = math.absf %0 : vector<1x1024xf32>
    %cst = arith.constant 0.000000e+00 : f32
    %3 = vector.broadcast %cst : f32 to vector<1x1024xf32>
    %4 = arith.subf %3, %2 : vector<1x1024xf32>
    %5 = math.exp %4 : vector<1x1024xf32>
    %cst_3 = arith.constant 0.000000e+00 : f32
    %6 = vector.broadcast %cst_3 : f32 to vector<1x1024xf32>
    %7 = arith.maximumf %0, %6 : vector<1x1024xf32>
    %8 = arith.mulf %0, %1 : vector<1x1024xf32>
    %9 = arith.subf %7, %8 : vector<1x1024xf32>
    %cst_4 = arith.constant 1.000000e+00 : f32
    %10 = vector.broadcast %cst_4 : f32 to vector<1x1024xf32>
    %11 = arith.addf %10, %5 : vector<1x1024xf32>
    %12 = math.log %11 : vector<1x1024xf32>
    %13 = arith.addf %9, %12 : vector<1x1024xf32>
    %cst_5 = arith.constant 1.000000e+00 : f32
    %14 = vector.broadcast %cst_5 : f32 to vector<1x1024xf32>
    %15 = arith.addf %14, %5 : vector<1x1024xf32>
    %cst_6 = arith.constant 1.000000e+00 : f32
    %16 = vector.broadcast %cst_6 : f32 to vector<1x1024xf32>
    %17 = arith.divf %16, %15 : vector<1x1024xf32>
    %cst_7 = arith.constant 0.000000e+00 : f32
    %18 = vector.broadcast %cst_7 : f32 to vector<1x1024xf32>
    %19 = arith.cmpf oge, %0, %18 : vector<1x1024xf32>
    %20 = arith.mulf %5, %17 : vector<1x1024xf32>
    %21 = arith.select %19, %17, %20 : vector<1x1024xi1>, vector<1x1024xf32>
    %cst_8 = arith.constant 2.000000e+00 : f32
    %22 = vector.broadcast %cst_8 : f32 to vector<1x1024xf32>
    %23 = arith.mulf %22, %1 : vector<1x1024xf32>
    %cst_9 = arith.constant 1.000000e+00 : f32
    %24 = vector.broadcast %cst_9 : f32 to vector<1x1024xf32>
    %25 = arith.subf %24, %23 : vector<1x1024xf32>
    %26 = arith.mulf %21, %25 : vector<1x1024xf32>
    %27 = arith.addf %26, %1 : vector<1x1024xf32>
    %28 = math.sqrt %27 : vector<1x1024xf32>
    %29 = arith.mulf %27, %28 : vector<1x1024xf32>
    %30 = arith.mulf %13, %29 : vector<1x1024xf32>
    %cst_10 = arith.constant -5.000000e-01 : f32
    %31 = vector.broadcast %cst_10 : f32 to vector<1x1024xf32>
    %32 = arith.mulf %1, %31 : vector<1x1024xf32>
    %cst_11 = arith.constant 7.500000e-01 : f32
    %33 = vector.broadcast %cst_11 : f32 to vector<1x1024xf32>
    %34 = arith.addf %32, %33 : vector<1x1024xf32>
    %35 = arith.mulf %30, %34 : vector<1x1024xf32>
    %36 = vector.shape_cast %35 : vector<1x1024xf32> to vector<1x1x1024xf32>
    %cst_12 = arith.constant dense<0.000000e+00> : vector<1xf32>
    %37 = vector.multi_reduction <add>, %36, %cst_12 [1, 2] : vector<1x1x1024xf32> to vector<1xf32>
    %38 = vector.shape_cast %37 : vector<1xf32> to vector<1x1x1xf32>
    %39 = vector.extract %38[0, 0, 0] : f32 from vector<1x1x1xf32>
    %40 = vector.broadcast %39 : f32 to vector<1x8x128xf32>
    %c0_13 = arith.constant 0 : index
    %c0_14 = arith.constant 0 : index
    %c0_15 = arith.constant 0 : index
    %41 = vector.load %arg3[%c0_13, %c0_14, %c0_15] : memref<1x8x128xf32, #tpu.memory_space<vmem>>, vector<1x8x128xf32>
    tpu.vector_store %arg3[%c0_13, %c0_14, %c0_15], %40 {strides = array<i32>} : memref<1x8x128xf32, #tpu.memory_space<vmem>>, vector<1x8x128xf32>,
    return
  }
  func.func @transform_0(%arg0: i32) -> (i32, i32) {
    %c0_i32 = arith.constant 0 : i32
    %c0_i32_0 = arith.constant 0 : i32
    return %arg0, %c0_i32 : i32, i32
  }
  func.func @transform_1(%arg0: i32) -> (i32, i32) {
    %c0_i32 = arith.constant 0 : i32
    %c0_i32_0 = arith.constant 0 : i32
    return %arg0, %c0_i32 : i32, i32
  }
  func.func @transform_2(%arg0: i32) -> (i32, i32, i32) {
    %c0_i32 = arith.constant 0 : i32
    %c0_i32_0 = arith.constant 0 : i32
    %c0_i32_1 = arith.constant 0 : i32
    return %arg0, %c0_i32, %c0_i32_0 : i32, i32, i32
  }
}

</mosaic_0001>

<llo_original>
// kernel: focal_loss.1
$region0: #{focal_loss.1}
  #allocation0 [shape = 'u32[]', space=smem, size = 0x4, offset = 0x4, fixed_abs, tag = 'smem constant byte address 0x4 - core index']
  #allocation1 [shape = 'u32[144,128]{1,0:T(1,128)}', space=vmem, size = 0x12000, scoped, tag = 'internal scratch']
  %s0 = inlined_call_operand.vmem [shape: f32[1,1024], index: 0, kind: input, shape index: {}]
  %s1 = inlined_call_operand.vmem [shape: f32[1,1024], index: 1, kind: input, shape index: {}]
  %s2 = inlined_call_operand.vmem [shape: f32[1,8,128], index: 2, kind: output, shape index: {}]
  %s3 = sld [smem:[#allocation0]]
  $region18: #{focal_loss.1} parent=0
    _
  %s5 = ssub.s32 1, %s3
  %s6 = scalar_select 0, %s5, %s3
  // Predicated region
  $region2: #{focal_loss.1} parent=0 // pred_check
    _
  $region3: #{focal_loss.1} parent=0 // pred_check_branch
    %8 = sbr.rel (0) target = $region5
  $region4: #{focal_loss.1} parent=0 // pred_region
    _
  $region5: #{focal_loss.1} parent=0 // pred_fallthru
    _
  // Predicated region
  $region6: #{focal_loss.1} parent=0 // pred_check
    _
  $region7: #{focal_loss.1} parent=0 // pred_check_branch
    %10 = sbr.rel (0) target = $region9
  $region8: #{focal_loss.1} parent=0 // pred_region
    _
  $region9: #{focal_loss.1} parent=0 // pred_fallthru
    _
  %v11 = vld [vmem:[%s0] sm:$0xff]
  %v12 = vld [vmem:[%s1] sm:$0xff]
  %v13 = vand.u32 2147483647, %v11
  %v14 = vsub.f32 0.0, %v13
  %v15 = vmul.f32 %v14, 1.442695
  %v16 = vpow.pop %v15
  %v17 = vmax.f32 %v11, 0.0
  %v18 = vmul.f32 %v11, %v12
  %v19 = vsub.f32 %v17, %v18
  %v20 = vadd.f32 %v16, 1.0
  %v21 = vlog2.pop %v20
  %v22 = vmul.f32 %v21, 0.6931472
  %v23 = vadd.f32 %v19, %v22
  %v24 = vrcp.pop %v20
  %v25 = vmul.f32 1.0, %v24
  %vm26 = vcmp.ge.f32.partialorder %v11, 0.0
  %v27 = vmul.f32 %v16, %v25
  %v28 = vsel %vm26, %v25, %v27
  %v29 = vmul.f32 %v12, 2.0
  %v30 = vsub.f32 1.0, %v29
  %v31 = vmul.f32 %v28, %v30
  %v32 = vadd.f32 %v31, %v12
  %v33 = vrsqrt.pop %v32
  %v34 = vmul.f32 %v32, %v33
  %vm35 = vcmp.eq.f32.partialorder %v32, inf
  %v36 = vsel %vm35, %v32, %v34
  %vm37 = vcmp.eq.f32.partialorder %v32, 0.0
  %v38 = vand.u32 %v32, 2147483648
  %v39 = vsel %vm37, %v38, %v36
  %v40 = vmul.f32 %v32, %v39
  %v41 = vmul.f32 %v23, %v40
  %v42 = vmul.f32 %v12, -0.5
  %v43 = vadd.f32 %v42, 0.75
  %v44 = vmul.f32 %v41, %v43
  %v46 = vlaneseq
  %v47 = vshrl.u32 %v46, 7
  %v48 = vsub.s32 0, %v47
  %v49 = vrot.slane %v44, %v48
  %v50 = vlaneseq
  %v51 = vshrl.u32 %v50, 7
  %v52 = vsub.s32 1, %v51
  %v53 = vrot.slane %v44, %v52
  %v54 = vlaneseq
  %v55 = vshrl.u32 %v54, 7
  %v56 = vsub.s32 2, %v55
  %v57 = vrot.slane %v44, %v56
  %v58 = vlaneseq
  %v59 = vshrl.u32 %v58, 7
  %v60 = vsub.s32 3, %v59
  %v61 = vrot.slane %v44, %v60
  %v62 = vlaneseq
  %v63 = vshrl.u32 %v62, 7
  %v64 = vsub.s32 4, %v63
  %v65 = vrot.slane %v44, %v64
  %v66 = vlaneseq
  %v67 = vshrl.u32 %v66, 7
  %v68 = vsub.s32 5, %v67
  %v69 = vrot.slane %v44, %v68
  %v70 = vlaneseq
  %v71 = vshrl.u32 %v70, 7
  %v72 = vsub.s32 6, %v71
  %v73 = vrot.slane %v44, %v72
  %v74 = vlaneseq
  %v75 = vshrl.u32 %v74, 7
  %v76 = vsub.s32 7, %v75
  %v77 = vrot.slane %v44, %v76
  %vm86 = vcmask 1040384
  %v87 = vsel %vm86, %v49, 0.0
  %v88 = vsel %vm86, %v53, 0.0
  %v89 = vadd.f32 %v87, %v88
  %v90 = vsel %vm86, %v57, 0.0
  %v91 = vadd.f32 %v89, %v90
  %v92 = vsel %vm86, %v61, 0.0
  %v93 = vadd.f32 %v91, %v92
  %v94 = vsel %vm86, %v65, 0.0
  %v95 = vadd.f32 %v93, %v94
  %v96 = vsel %vm86, %v69, 0.0
  %v97 = vadd.f32 %v95, %v96
  %v98 = vsel %vm86, %v73, 0.0
  %v99 = vadd.f32 %v97, %v98
  %v100 = vsel %vm86, %v77, 0.0
  %v101 = vadd.f32 %v99, %v100
  %102 = vadd.xlane.f32.xlu0 %v101
  %v103 = vpop.xlane.xlu0 %102
  %v104 = vrot.slane %v103, 4
  %v105 = vadd.f32 %v103, %v104
  %v106 = vrot.slane %v105, 2
  %v107 = vadd.f32 %v105, %v106
  %v108 = vrot.slane %v107, 1
  %v109 = vadd.f32 %v107, %v108
  %s110 = vtos %v109
  %v111 = vstv %s110
  %112 = vst [vmem:[%s2] sm:$0xff] %v111
  // Predicated region
  $region10: #{focal_loss.1} parent=0 // pred_check
    _
  $region11: #{focal_loss.1} parent=0 // pred_check_branch
    %114 = sbr.rel (0) target = $region13
  $region12: #{focal_loss.1} parent=0 // pred_region
    _
  $region13: #{focal_loss.1} parent=0 // pred_fallthru
    _
  // Predicated region
  $region14: #{focal_loss.1} parent=0 // pred_check
    _
  $region15: #{focal_loss.1} parent=0 // pred_check_branch
    %116 = sbr.rel (0) target = $region17
  $region16: #{focal_loss.1} parent=0 // pred_region
    _
  $region17: #{focal_loss.1} parent=0 // pred_fallthru
    _

</llo_original>
